<compile_context>
chip_gen: v7x
topology: tpu7x:2x2x1
jax: 0.10.0
libtpu: 0.0.40
codegen_flags: <defaults>
</compile_context>

<pallas_src>
import functools

import jax
import jax.numpy as jnp
from jax.experimental import pallas as pl
from jax.experimental.pallas import tpu as pltpu

LANE = 128      # vreg lane width
SUBLANE = 8     # f32 vreg sublane count


# -----------------------------------------------------------------------------
# TPU-generation-aware tiling configuration.
# -----------------------------------------------------------------------------
def _tpu_generation():
    try:
        kind = jax.devices()[0].device_kind.lower()
    except Exception:
        kind = ""
    if "v7" in kind or "7x" in kind:
        return "v7x"
    if "v6" in kind:
        return "v6e"
    if "v5" in kind:
        return "v5e"
    return "unknown"


# gen -> (double-buffered tile VMEM budget per core, vmem_limit_bytes, core-split grid)
_GEN_CONFIG = {
    # v7x: 64 MiB physical VMEM shared by 2 TCs once CORE_PARALLEL splits the
    # grid -> keep the per-core budget modest so both cores' double buffers fit.
    "v7x": (12 * 2**20, 24 * 2**20, True),
    # v6e: 128 MiB physical -> bigger tiles keep high-degree nodes on the roofline.
    "v6e": (28 * 2**20, 40 * 2**20, False),
    # v5e (16 MiB scoped default) / unknown: conservative.
    "v5e": (12 * 2**20, 20 * 2**20, False),
    "unknown": (12 * 2**20, 20 * 2**20, False),
}


def _compiler_params(core_parallel, vmem_limit_bytes):
    if core_parallel:
        # Actually shard tiles across v7x's two TensorCores.  Fall back to the
        # plain string on older jax builds that lack the enum.
        sem = getattr(pltpu, "CORE_PARALLEL", "parallel")
    else:
        sem = "parallel"
    return pltpu.CompilerParams(
        dimension_semantics=(sem,), vmem_limit_bytes=vmem_limit_bytes)


def _tile_rows(degree, in_itemsize, out_itemsize, budget, max_rows):
    """Rows of 128 lanes per grid step, sized to the double-buffered VMEM budget."""
    # One "row" = 128 lanes of every operand: degree input rows + degree c2v
    # rows + 1 parity row; x2 for the double-buffered auto-pipeline.
    bytes_per_row = LANE * (degree * (in_itemsize + out_itemsize) + out_itemsize)
    tr = (budget // (2 * bytes_per_row)) // SUBLANE * SUBLANE
    tr = max(tr, SUBLANE)
    # Either a multiple of 8, or the full row extent (both satisfy the (8,128) rule).
    return max_rows if tr >= max_rows else tr


# -----------------------------------------------------------------------------
# Kernels.
# -----------------------------------------------------------------------------
def _mod2(x):
    # x % 2 with Python/torch sign-of-divisor semantics; cheaper than jnp.mod's
    # rem + sign-fix chain (protects the mem-bound roofline on v7x where the
    # per-TC VALU/HBM margin is thinner).
    return x - 2.0 * jnp.floor(x * 0.5)


def _check_node_kernel_3d(v2c_ref, c2v_ref, parity_ref, *, binary_messages):
    # Blocks: v2c (degree, TR, 128) / c2v (degree, TR, 128) / parity (TR, 128).
    # Compute in f32 regardless of the HBM dtype (v5e has no bf16 VALU path).
    v2c = v2c_ref[...].astype(jnp.float32)
    s = jnp.sum(v2c, axis=0)                       # (degree-1) whole-vreg VPU adds
    parity = _mod2(s)
    parity_ref[...] = parity.astype(parity_ref.dtype)      # lane-dense stores
    if binary_messages:
        # Exact only for hard-decision 0/1 messages: (s - v2c) % 2 == |s%2 - v2c|.
        c2v = jnp.abs(parity[None, :, :] - v2c)
    else:
        c2v = _mod2(s[None, :, :] - v2c)
    c2v_ref[...] = c2v.astype(c2v_ref.dtype)


def _check_node_kernel_2d(v2c_ref, c2v_ref, parity_ref, *, binary_messages):
    # Blocks: v2c (degree, TC) / c2v (degree, TC) / parity (1, TC); TC is a
    # multiple of 128 (or the full last dim), so stores stay lane-dense even
    # when N itself is not 128-aligned.  Pallas masks the partial tail block.
    v2c = v2c_ref[...].astype(jnp.float32)
    s = jnp.sum(v2c, axis=0, keepdims=True)        # (1, TC)
    parity = _mod2(s)
    parity_ref[...] = parity.astype(parity_ref.dtype)
    if binary_messages:
        c2v = jnp.abs(parity - v2c)
    else:
        c2v = _mod2(s - v2c)
    c2v_ref[...] = c2v.astype(c2v_ref.dtype)


# -----------------------------------------------------------------------------
# Wrappers.
# -----------------------------------------------------------------------------
def check_node_forward(v2c, *, binary_messages=False, out_dtype=None):
    """Pallas implementation of CheckNode.forward.

    Args:
      v2c: (degree, N) float array of incoming variable->check messages.
      binary_messages: use the cheaper |parity - v2c| identity (exact only for
        0/1 hard-decision messages; soft inputs must keep the default).
      out_dtype: optional narrower HBM dtype for the outputs (e.g. bf16 / int8
        hard decisions) — compute stays f32 inside the kernel.

    Returns:
      (c2v, parity_check): ((degree, N), (N,)) matching the PyTorch module.
    """
    degree, n = v2c.shape
    in_dtype = jnp.dtype(v2c.dtype)
    out_dtype = in_dtype if out_dtype is None else jnp.dtype(out_dtype)

    gen = _tpu_generation()
    budget, vmem_limit, core_parallel = _GEN_CONFIG[gen]
    cparams = _compiler_params(core_parallel, vmem_limit)

    if n % LANE == 0:
        # ---- dense (degree, R, 128) path: free minor-dim reshape, fully
        # (sublane, lane)-dense vreg tiles, VPU-only degree reduction. ----
        r = n // LANE
        tr = _tile_rows(degree, in_dtype.itemsize, out_dtype.itemsize, budget, r)
        kernel = functools.partial(_check_node_kernel_3d,
                                   binary_messages=binary_messages)
        c2v, parity = pl.pallas_call(
            kernel,
            grid=(pl.cdiv(r, tr),),
            out_shape=(
                jax.ShapeDtypeStruct((degree, r, LANE), out_dtype),   # c2v
                jax.ShapeDtypeStruct((r, LANE), out_dtype),           # parity
            ),
            in_specs=[pl.BlockSpec((degree, tr, LANE), lambda i: (0, i, 0))],
            out_specs=(
                pl.BlockSpec((degree, tr, LANE), lambda i: (0, i, 0)),
                pl.BlockSpec((tr, LANE), lambda i: (i, 0)),
            ),
            compiler_params=cparams,
        )(v2c.reshape(degree, r, LANE))
        return c2v.reshape(degree, n), parity.reshape(n)

    # ---- 2-D path for N % 128 != 0: no pad/reshape/slice HBM copies; the
    # block's sublane dim is the full `degree` axis and Pallas masks the
    # partial last column block. ----
    max_rows = pl.cdiv(n, LANE)
    tr = _tile_rows(degree, in_dtype.itemsize, out_dtype.itemsize, budget, max_rows)
    tc = n if tr >= max_rows else tr * LANE
    kernel = functools.partial(_check_node_kernel_2d,
                               binary_messages=binary_messages)
    c2v, parity = pl.pallas_call(
        kernel,
        grid=(pl.cdiv(n, tc),),
        out_shape=(
            jax.ShapeDtypeStruct((degree, n), out_dtype),             # c2v
            jax.ShapeDtypeStruct((1, n), out_dtype),                  # parity
        ),
        in_specs=[pl.BlockSpec((degree, tc), lambda i: (0, i))],
        out_specs=(
            pl.BlockSpec((degree, tc), lambda i: (0, i)),
            pl.BlockSpec((1, tc), lambda i: (0, i)),
        ),
        compiler_params=cparams,
    )(v2c)
    return c2v, parity.reshape(n)


def check_node_forward_batched(v2c_nodes, **kwargs):
    """Run many same-degree check nodes in ONE kernel launch.

    v2c_nodes: (num_nodes, degree, N).  The node axis is folded into the
    column axis (one transpose pass, amortized over the whole codeword) so the
    kernel runs at its roofline tile size instead of num_nodes tiny launches.
    Returns ((num_nodes, degree, N) c2v, (num_nodes, N) parity).
    """
    num_nodes, degree, n = v2c_nodes.shape
    flat = jnp.swapaxes(v2c_nodes, 0, 1).reshape(degree, num_nodes * n)
    c2v, parity = check_node_forward(flat, **kwargs)
    c2v = jnp.swapaxes(c2v.reshape(degree, num_nodes, n), 0, 1)
    return c2v, parity.reshape(num_nodes, n)


class CheckNodePallas:
    """Mirror of the PyTorch CheckNode module (non-trainable buffers)."""

    def __init__(self, degree=4, stype=jnp.float32):
        self.stype = stype
        self.degree = degree
        # torch.ones(degree, 1) / torch.ones(1) buffer init (overwritten by forward).
        self.c2v = jnp.ones((degree, 1), dtype=stype)
        self.parity_check = jnp.ones((1,), dtype=stype)

    def __call__(self, v2c, *, binary_messages=False):
        c2v, parity = check_node_forward(
            v2c.astype(self.stype),
            binary_messages=binary_messages,
            out_dtype=self.stype,
        )
        # Persist, mimicking the in-place .data assignment in PyTorch.
        self.c2v = c2v
        self.parity_check = parity
        return self.c2v, self.parity_check


if __name__ == "__main__":
    key = jax.random.PRNGKey(0)
    k1, k2, k3 = jax.random.split(key, 3)

    def reference(v2c):
        s = jnp.sum(v2c, axis=0)
        return jnp.mod(s[None, :] - v2c, 2.0), jnp.mod(s, 2.0)

    # 1) Hard-decision binary messages, lane-aligned N (dense 3-D path).
    degree, n = 4, 512
    v2c_a = jax.random.randint(k1, (degree, n), 0, 2).astype(jnp.float32)
    node = CheckNodePallas(degree=degree, stype=jnp.float32)
    c2v_a, par_a = node(v2c_a)
    c2v_a, par_a = jax.block_until_ready((c2v_a, par_a))
    c2v_r, par_r = reference(v2c_a)
    assert c2v_a.shape == (degree, n) and par_a.shape == (n,)
    assert jnp.allclose(c2v_a, c2v_r), "aligned c2v mismatch"
    assert jnp.allclose(par_a, par_r), "aligned parity_check mismatch"

    # 2) Soft (signed) quarter-integer messages, N not divisible by 128
    #    (2-D masked-tail path, exercises negative-value '%' semantics).
    degree, n = 4, 300
    v2c_b = (jax.random.randint(k2, (degree, n), -8, 8) * 0.25).astype(jnp.float32)
    c2v_b, par_b = check_node_forward(v2c_b)
    c2v_b, par_b = jax.block_until_ready((c2v_b, par_b))
    c2v_r, par_r = reference(v2c_b)
    assert c2v_b.shape == (degree, n) and par_b.shape == (n,)
    assert jnp.allclose(c2v_b, c2v_r, atol=1e-6), "unaligned c2v mismatch"
    assert jnp.allclose(par_b, par_r, atol=1e-6), "unaligned parity_check mismatch"

    # 3) Batched helper: 3 same-degree check nodes in one launch.
    v2c_c = jax.random.randint(k3, (3, 4, 200), 0, 2).astype(jnp.float32)
    c2v_c, par_c = check_node_forward_batched(v2c_c)
    c2v_c, par_c = jax.block_until_ready((c2v_c, par_c))
    for m in range(3):
        c2v_r, par_r = reference(v2c_c[m])
        assert jnp.allclose(c2v_c[m], c2v_r), "batched c2v mismatch"
        assert jnp.allclose(par_c[m], par_r), "batched parity_check mismatch"

    print("KERNEL_OK")
</pallas_src>

<mosaic_0001>
module attributes {stable_mosaic.version = 11 : i64} {
  func.func @_check_node_kernel_3d(%arg0: i32, %arg1: memref<4x4x128xf32, #tpu.memory_space<vmem>>, %arg2: memref<4x4x128xf32, #tpu.memory_space<vmem>>, %arg3: memref<4x128xf32, #tpu.memory_space<vmem>>) attributes {dimension_semantics = [#tpu.dimension_semantics<parallel>], iteration_bounds = array<i64: 1>, scalar_prefetch = 0 : i64, scratch_operands = 0 : i64, tpu.core_type = #tpu.core_type<tc>, window_params = [{transform_indices = @transform_0, window_bounds = array<i64: 4, 4, 128>}, {transform_indices = @transform_1, window_bounds = array<i64: 4, 4, 128>}, {transform_indices = @transform_2, window_bounds = array<i64: 4, 128>}]} {
    %c0 = arith.constant 0 : index
    %c0_0 = arith.constant 0 : index
    %c0_1 = arith.constant 0 : index
    %0 = vector.load %arg1[%c0, %c0_0, %c0_1] : memref<4x4x128xf32, #tpu.memory_space<vmem>>, vector<4x4x128xf32>
    %cst = arith.constant dense<0.000000e+00> : vector<4x128xf32>
    %1 = vector.multi_reduction <add>, %0, %cst [0] : vector<4x4x128xf32> to vector<4x128xf32>
    %cst_2 = arith.constant 5.000000e-01 : f32
    %2 = vector.broadcast %cst_2 : f32 to vector<4x128xf32>
    %3 = arith.mulf %1, %2 : vector<4x128xf32>
    %4 = math.floor %3 : vector<4x128xf32>
    %cst_3 = arith.constant 2.000000e+00 : f32
    %5 = vector.broadcast %cst_3 : f32 to vector<4x128xf32>
    %6 = arith.mulf %5, %4 : vector<4x128xf32>
    %7 = arith.subf %1, %6 : vector<4x128xf32>
    %c0_4 = arith.constant 0 : index
    %c0_5 = arith.constant 0 : index
    %8 = vector.load %arg3[%c0_4, %c0_5] : memref<4x128xf32, #tpu.memory_space<vmem>>, vector<4x128xf32>
    tpu.vector_store %arg3[%c0_4, %c0_5], %7 {strides = array<i32>} : memref<4x128xf32, #tpu.memory_space<vmem>>, vector<4x128xf32>,
    %9 = vector.shape_cast %1 : vector<4x128xf32> to vector<1x4x128xf32>
    %10 = vector.broadcast %9 : vector<1x4x128xf32> to vector<4x4x128xf32>
    %11 = arith.subf %10, %0 : vector<4x4x128xf32>
    %cst_6 = arith.constant 5.000000e-01 : f32
    %12 = vector.broadcast %cst_6 : f32 to vector<4x4x128xf32>
    %13 = arith.mulf %11, %12 : vector<4x4x128xf32>
    %14 = math.floor %13 : vector<4x4x128xf32>
    %cst_7 = arith.constant 2.000000e+00 : f32
    %15 = vector.broadcast %cst_7 : f32 to vector<4x4x128xf32>
    %16 = arith.mulf %15, %14 : vector<4x4x128xf32>
    %17 = arith.subf %11, %16 : vector<4x4x128xf32>
    %c0_8 = arith.constant 0 : index
    %c0_9 = arith.constant 0 : index
    %c0_10 = arith.constant 0 : index
    %18 = vector.load %arg2[%c0_8, %c0_9, %c0_10] : memref<4x4x128xf32, #tpu.memory_space<vmem>>, vector<4x4x128xf32>
    tpu.vector_store %arg2[%c0_8, %c0_9, %c0_10], %17 {strides = array<i32>} : memref<4x4x128xf32, #tpu.memory_space<vmem>>, vector<4x4x128xf32>,
    return
  }
  func.func @transform_0(%arg0: i32) -> (i32, i32, i32) {
    %c0_i32 = arith.constant 0 : i32
    %c0_i32_0 = arith.constant 0 : i32
    %c0_i32_1 = arith.constant 0 : i32
    return %c0_i32, %arg0, %c0_i32_0 : i32, i32, i32
  }
  func.func @transform_1(%arg0: i32) -> (i32, i32, i32) {
    %c0_i32 = arith.constant 0 : i32
    %c0_i32_0 = arith.constant 0 : i32
    %c0_i32_1 = arith.constant 0 : i32
    return %c0_i32, %arg0, %c0_i32_0 : i32, i32, i32
  }
  func.func @transform_2(%arg0: i32) -> (i32, i32) {
    %c0_i32 = arith.constant 0 : i32
    %c0_i32_0 = arith.constant 0 : i32
    return %arg0, %c0_i32 : i32, i32
  }
}

</mosaic_0001>

<llo_original>
// kernel: tpu_custom_call.1
$region0: #{tpu_custom_call.1}
  #allocation0 [shape = 'u32[]', space=smem, size = 0x4, offset = 0x4, fixed_abs, tag = 'smem constant byte address 0x4 - core index']
  #allocation1 [shape = 'u32[144,128]{1,0:T(1,128)}', space=vmem, size = 0x12000, scoped, tag = 'internal scratch']
  %s0 = inlined_call_operand.hbm [shape: f32[4,4,128], index: 0, kind: input, shape index: {}]
  %s1 = inlined_call_operand.hbm [shape: f32[4,4,128], index: 1, kind: output, shape index: {0}]
  %s2 = inlined_call_operand.hbm [shape: f32[4,128], index: 2, kind: output, shape index: {1}]
  %3 = xla_tuple %s1, %s2
  %s4 = sld [smem:[#allocation0]]
  $region26: #{tpu_custom_call.1} parent=0
    _
  %s6 = ssub.s32 1, %s4
  %s7 = scalar_select 0, %s6, %s4
  $region1: #{tpu_custom_call.1} parent=0
    #allocation2 [shape = 'u8[8192]{0}', space=vmem, size = 0x2000, scoped, tag = 'input window, operand 0, single buffered']
    #allocation3 [shape = 's32[1]{0}', space=sflag, size = 0x4, scoped, tag = 'scoped memory for tpu_custom_call.1']
    #allocation4 [shape = 's32[1]{0}', space=sflag, size = 0x4, scoped, tag = 'scoped memory for tpu_custom_call.1']
    #allocation5 [shape = 'u8[8192]{0}', space=vmem, size = 0x2000, scoped, tag = 'output window, operand 0, single buffered']
    #allocation6 [shape = 'u8[2048]{0}', space=vmem, size = 0x800, scoped, tag = 'output window, operand 1, single buffered']
    #allocation7 [shape = 's32[1]{0}', space=sflag, size = 0x4, scoped, tag = 'scoped memory for tpu_custom_call.1']
    %8 = vsyncpa [#allocation3], 0
    %9 = vsyncpa [#allocation4], 0
    %10 = vsyncpa [#allocation7], 0
    // Predicated region
    $region2: #{tpu_custom_call.1} parent=1 // pred_check
      _
    $region3: #{tpu_custom_call.1} parent=1 // pred_check_branch
      %12 = sbr.rel (0) target = $region5
    $region4: #{tpu_custom_call.1} parent=1 // pred_region
      %s14 = ssub.s32 256, 256
      %15 = vsyncadd [#allocation3], %s14
      %s16 = sshll.u32 [#allocation2], 4
      %s17 = int_to_ptr.vmem [resolvable:$true] %s16
      %22 = dma.hbm_to_vmem [thread:$0]  %s0, 256, %s17, [#allocation3], 64, 64, 4
    $region5: #{tpu_custom_call.1} parent=1 // pred_fallthru
      _
    // Predicated region
    $region6: #{tpu_custom_call.1} parent=1 // pred_check
      _
    $region7: #{tpu_custom_call.1} parent=1 // pred_check_branch
      %24 = sbr.rel (0) target = $region9
    $region8: #{tpu_custom_call.1} parent=1 // pred_region
      %25 = dma.done [#allocation3], 256
    $region9: #{tpu_custom_call.1} parent=1 // pred_fallthru
      _
    %v26 = vld [vmem:[#allocation2] sm:$0xf]
    %v27 = vld [vmem:[#allocation2 + $0x4] sm:$0xf]
    %v28 = vld [vmem:[#allocation2 + $0x8] sm:$0xf]
    %v29 = vld [vmem:[#allocation2 + $0xc] sm:$0xf]
    %vm30 = vcmask 1043456
    %v31 = vsel %vm30, %v26, 0.0
    %v32 = vsel %vm30, %v27, 0.0
    %v33 = vadd.f32 %v31, %v32
    %v34 = vsel %vm30, %v28, 0.0
    %v35 = vadd.f32 %v33, %v34
    %v36 = vsel %vm30, %v29, 0.0
    %v37 = vadd.f32 %v35, %v36
    %v38 = vmul.f32 %v37, 0.5
    %v39 = vfloor.f32 %v38
    %v40 = vmul.f32 %v39, 2.0
    %v41 = vsub.f32 %v37, %v40
    %42 = vst [vmem:[#allocation6] sm:$0xf] %v41
    %v43 = vsub.f32 %v37, %v26
    %v44 = vsub.f32 %v37, %v27
    %v45 = vsub.f32 %v37, %v28
    %v46 = vsub.f32 %v37, %v29
    %v47 = vmul.f32 %v43, 0.5
    %v48 = vmul.f32 %v44, 0.5
    %v49 = vmul.f32 %v45, 0.5
    %v50 = vmul.f32 %v46, 0.5
    %v51 = vfloor.f32 %v47
    %v52 = vfloor.f32 %v48
    %v53 = vfloor.f32 %v49
    %v54 = vfloor.f32 %v50
    %v55 = vmul.f32 %v51, 2.0
    %v56 = vmul.f32 %v52, 2.0
    %v57 = vmul.f32 %v53, 2.0
    %v58 = vmul.f32 %v54, 2.0
    %v59 = vsub.f32 %v43, %v55
    %v60 = vsub.f32 %v44, %v56
    %v61 = vsub.f32 %v45, %v57
    %v62 = vsub.f32 %v46, %v58
    %63 = vst [vmem:[#allocation5] sm:$0xf] %v59
    %64 = vst [vmem:[#allocation5 + $0x4] sm:$0xf] %v60
    %65 = vst [vmem:[#allocation5 + $0x8] sm:$0xf] %v61
    %66 = vst [vmem:[#allocation5 + $0xc] sm:$0xf] %v62
    // Predicated region
    $region10: #{tpu_custom_call.1} parent=1 // pred_check
      _
    $region11: #{tpu_custom_call.1} parent=1 // pred_check_branch
      %68 = sbr.rel (0) target = $region13
    $region12: #{tpu_custom_call.1} parent=1 // pred_region
      %s70 = ssub.s32 256, 256
      %71 = vsyncadd [#allocation4], %s70
      %s72 = sshll.u32 [#allocation5], 4
      %s73 = int_to_ptr.vmem [resolvable:$true] %s72
      %78 = dma.vmem_to_hbm [thread:$0]  %s73, 256, %s1, [#allocation4], 64, 64, 4
    $region13: #{tpu_custom_call.1} parent=1 // pred_fallthru
      _
    // Predicated region
    $region14: #{tpu_custom_call.1} parent=1 // pred_check
      _
    $region15: #{tpu_custom_call.1} parent=1 // pred_check_branch
      %80 = sbr.rel (0) target = $region17
    $region16: #{tpu_custom_call.1} parent=1 // pred_region
      %s82 = ssub.s32 64, 64
      %83 = vsyncadd [#allocation7], %s82
      %s85 = sshll.u32 [#allocation6], 4
      %s86 = int_to_ptr.vmem [resolvable:$true] %s85
      %88 = dma.vmem_to_hbm [thread:$0]  %s86, 64, %s2, [#allocation7]
    $region17: #{tpu_custom_call.1} parent=1 // pred_fallthru
      _
    // Predicated region
    $region18: #{tpu_custom_call.1} parent=1 // pred_check
      _
    $region19: #{tpu_custom_call.1} parent=1 // pred_check_branch
      %90 = sbr.rel (0) target = $region21
    $region20: #{tpu_custom_call.1} parent=1 // pred_region
      %91 = dma.done [#allocation4], 256
    $region21: #{tpu_custom_call.1} parent=1 // pred_fallthru
      _
    // Predicated region
    $region22: #{tpu_custom_call.1} parent=1 // pred_check
      _
    $region23: #{tpu_custom_call.1} parent=1 // pred_check_branch
      %93 = sbr.rel (0) target = $region25
    $region24: #{tpu_custom_call.1} parent=1 // pred_region
      %94 = dma.done [#allocation7], 64
    $region25: #{tpu_custom_call.1} parent=1 // pred_fallthru
      _
    %95 = vsyncpa [#allocation3], 1
    %96 = vsyncpa [#allocation4], 1
    %97 = vsyncpa [#allocation7], 1

</llo_original>
